<compile_context>
chip_gen: v5e
topology: v5e:2x2
jax: 0.10.0
libtpu: 0.0.40
codegen_flags: <defaults>
</compile_context>

<pallas_src>
import jax
import jax.numpy as jnp
from jax.experimental import pallas as pl
from jax.experimental.pallas import tpu as pltpu

LANE = 128          # vreg lane width
BF16_ROWS = 16      # bf16 packs 16 rows per vreg (sublane packing)


def _round_up(x, m):
    return ((x + m - 1) // m) * m


def mlp_kernel(x_ref, w1_ref, b1_ref, w2_ref, b2_ref, w3_ref, b3_ref, o_ref):
    # Matmul operands are bf16 -> MXU; accumulation + elementwise path in f32.
    x = x_ref[...]                                                        # (TB, n_in) bf16

    # Layer 1: Linear + ReLU
    h1 = jnp.dot(x, w1_ref[...], preferred_element_type=jnp.float32) + b1_ref[...]
    h1 = jnp.maximum(h1, 0.0)                                             # f32 (VPU)

    # Layer 2: Linear + Sigmoid
    h2 = jnp.dot(h1.astype(w2_ref.dtype), w2_ref[...],
                 preferred_element_type=jnp.float32) + b2_ref[...]
    h2 = jax.nn.sigmoid(h2)                                               # f32 (EUP)

    # Layer 3: Linear (no activation)
    out = jnp.dot(h2.astype(w3_ref.dtype), w3_ref[...],
                  preferred_element_type=jnp.float32) + b3_ref[...]
    o_ref[...] = out.astype(o_ref.dtype)                                  # lane-dense vst


def prepare_params(params):
    """One-time prep (call at init, NOT per forward): pad hidden/output dims to 128
    lanes, cast weights to bf16, keep biases in f32.  Zero padding keeps the math exact
    (padded hidden lanes -> sigmoid(0)=0.5, killed by zero-padded W3 rows)."""
    w1, b1 = params["w1"], params["b1"]
    w2, b2 = params["w2"], params["b2"]
    w3, b3 = params["w3"], params["b3"]
    n_in, n_hid = w1.shape
    n_out = w3.shape[1]
    n_hid_p = _round_up(n_hid, LANE)
    n_out_p = _round_up(n_out, LANE)

    def pad_w(w, rp, cp):
        return jnp.zeros((rp, cp), jnp.bfloat16).at[:w.shape[0], :w.shape[1]].set(
            w.astype(jnp.bfloat16))

    def pad_b(b, cp):
        return jnp.zeros((1, cp), jnp.float32).at[:, :b.shape[1]].set(
            b.astype(jnp.float32))

    return {
        "w1": pad_w(w1, n_in, n_hid_p), "b1": pad_b(b1, n_hid_p),
        "w2": pad_w(w2, n_hid_p, n_hid_p), "b2": pad_b(b2, n_hid_p),
        "w3": pad_w(w3, n_hid_p, n_out_p), "b3": pad_b(b3, n_out_p),
        "n_input": n_in, "n_hidden": n_hid, "n_output": n_out,
    }


def mlp_forward(x, prepared, *, tile_b=512, out_dtype=jnp.bfloat16):
    """x: (B, n_input) float/bf16.  `prepared`: output of prepare_params (pre-padded)."""
    B, n_in = x.shape
    assert n_in == prepared["n_input"], "input feature dim mismatch"
    n_hid_p = prepared["w2"].shape[0]
    n_out_p = prepared["w3"].shape[1]
    n_out = prepared["n_output"]

    # ---- batch tile: >=16 rows (bf16 packing), multiple of 16; aim for >=2 grid steps
    # when the batch is big enough so v7x megacore gets work on both TensorCores.
    tb = max(BF16_ROWS, min(tile_b, _round_up(B, BF16_ROWS)))
    if B >= 2 * BF16_ROWS:
        tb = min(tb, _round_up(-(-B // 2), BF16_ROWS))
    B_pad = _round_up(B, tb)

    # ---- input: bf16 cast only; zero-pad the batch only when not tile-aligned ---------
    xb = x.astype(jnp.bfloat16)
    if B_pad != B:
        xb = jnp.zeros((B_pad, n_in), jnp.bfloat16).at[:B].set(xb)

    grid = (B_pad // tb,)
    full = lambda i: (0, 0)   # weights/biases: same full block every grid step

    out_bytes = B_pad * n_out_p * jnp.dtype(out_dtype).itemsize
    cost = pl.CostEstimate(
        flops=2 * B_pad * (n_in * n_hid_p + n_hid_p * n_hid_p + n_hid_p * n_out_p),
        transcendentals=B_pad * n_hid_p,                     # sigmoid (EUP)
        bytes_accessed=(B_pad * n_in * 2                     # x bf16
                        + 2 * (n_in * n_hid_p + n_hid_p * n_hid_p + n_hid_p * n_out_p)
                        + 4 * (2 * n_hid_p + n_out_p)        # biases f32
                        + out_bytes),
    )

    out_pad = pl.pallas_call(
        mlp_kernel,
        out_shape=jax.ShapeDtypeStruct((B_pad, n_out_p), out_dtype),
        grid=grid,
        in_specs=[
            pl.BlockSpec((tb, n_in), lambda i: (i, 0)),       # x tile over batch (K unpadded)
            pl.BlockSpec((n_in, n_hid_p), full),              # W1 (bf16)
            pl.BlockSpec((1, n_hid_p), full),                 # b1 (f32)
            pl.BlockSpec((n_hid_p, n_hid_p), full),           # W2 (bf16)
            pl.BlockSpec((1, n_hid_p), full),                 # b2 (f32)
            pl.BlockSpec((n_hid_p, n_out_p), full),           # W3 (bf16)
            pl.BlockSpec((1, n_out_p), full),                 # b3 (f32)
        ],
        out_specs=pl.BlockSpec((tb, n_out_p), lambda i: (i, 0)),  # lane-dense output slab
        compiler_params=pltpu.CompilerParams(
            dimension_semantics=("parallel",)),                   # megacore over batch
        cost_estimate=cost,
    )(xb, prepared["w1"], prepared["b1"], prepared["w2"], prepared["b2"],
      prepared["w3"], prepared["b3"])

    return out_pad[:B, :n_out]   # NB: never reduce over out_pad before this slice


def init_params(key, n_input, n_hidden, n_output):
    """Deterministic init mimicking torch.nn.Linear (uniform ±1/sqrt(fan_in)).
    Weights stored already transposed: shape (in_features, out_features)."""
    ks = jax.random.split(key, 6)

    def lin(kw, kb, fan_in, fan_out):
        bound = 1.0 / jnp.sqrt(fan_in)
        w = jax.random.uniform(kw, (fan_in, fan_out), jnp.float32, -bound, bound)
        b = jax.random.uniform(kb, (1, fan_out), jnp.float32, -bound, bound)
        return w, b

    w1, b1 = lin(ks[0], ks[1], n_input, n_hidden)
    w2, b2 = lin(ks[2], ks[3], n_hidden, n_hidden)
    w3, b3 = lin(ks[4], ks[5], n_hidden, n_output)
    return {"w1": w1, "b1": b1, "w2": w2, "b2": b2, "w3": w3, "b3": b3}


def reference_forward_bf16(x, p):
    """Same numerics as the kernel's compute path: bf16 MXU operands, f32 accumulate."""
    bf = jnp.bfloat16
    h1 = jnp.dot(x.astype(bf), p["w1"].astype(bf),
                 preferred_element_type=jnp.float32) + p["b1"]
    h1 = jnp.maximum(h1, 0.0)
    h2 = jnp.dot(h1.astype(bf), p["w2"].astype(bf),
                 preferred_element_type=jnp.float32) + p["b2"]
    h2 = jax.nn.sigmoid(h2)
    return jnp.dot(h2.astype(bf), p["w3"].astype(bf),
                   preferred_element_type=jnp.float32) + p["b3"]


def reference_forward_f32(x, p):
    h1 = jnp.maximum(x @ p["w1"] + p["b1"], 0.0)
    h2 = jax.nn.sigmoid(h1 @ p["w2"] + p["b2"])
    return h2 @ p["w3"] + p["b3"]


if __name__ == "__main__":
    # Small shapes consistent with Net(n_input, n_hidden, n_output)
    batch, n_input, n_hidden, n_output = 8, 16, 32, 4

    key = jax.random.PRNGKey(0)
    kx, kp = jax.random.split(key)
    x = jax.random.normal(kx, (batch, n_input), jnp.float32)
    params = init_params(kp, n_input, n_hidden, n_output)
    prepared = prepare_params(params)          # one-time weight prep (hoisted out of fwd)

    out = mlp_forward(x, prepared)
    out = jax.block_until_ready(out)
    assert out.shape == (batch, n_output)
    out_f32 = out.astype(jnp.float32)

    # Match against a reference with identical bf16-matmul / f32-accumulate numerics
    # (output is bf16, so allow bf16 rounding), and sanity-check against pure f32 math.
    ref_bf16 = reference_forward_bf16(x, params)
    ref_f32 = reference_forward_f32(x, params)
    assert jnp.allclose(out_f32, ref_bf16, atol=2e-2, rtol=2e-2), "mismatch vs bf16 reference"
    assert jnp.allclose(out_f32, ref_f32, atol=6e-2, rtol=6e-2), "mismatch vs f32 reference"

    print("KERNEL_OK")
</pallas_src>

<mosaic_0001>
module attributes {stable_mosaic.version = 11 : i64} {
  func.func @mlp_kernel(%arg0: i32, %arg1: memref<16x16xbf16, #tpu.memory_space<vmem>>, %arg2: memref<16x128xbf16, #tpu.memory_space<vmem>>, %arg3: memref<1x128xf32, #tpu.memory_space<vmem>>, %arg4: memref<128x128xbf16, #tpu.memory_space<vmem>>, %arg5: memref<1x128xf32, #tpu.memory_space<vmem>>, %arg6: memref<128x128xbf16, #tpu.memory_space<vmem>>, %arg7: memref<1x128xf32, #tpu.memory_space<vmem>>, %arg8: memref<16x128xbf16, #tpu.memory_space<vmem>>) attributes {dimension_semantics = [#tpu.dimension_semantics<parallel>], iteration_bounds = array<i64: 1>, scalar_prefetch = 0 : i64, scratch_operands = 0 : i64, tpu.core_type = #tpu.core_type<tc>, window_params = [{transform_indices = @transform_0, window_bounds = array<i64: 16, 16>}, {pipeline_mode = #tpu.pipeline_mode<synchronous>, transform_indices = @transform_1, window_bounds = array<i64: 16, 128>}, {pipeline_mode = #tpu.pipeline_mode<synchronous>, transform_indices = @transform_2, window_bounds = array<i64: 1, 128>}, {pipeline_mode = #tpu.pipeline_mode<synchronous>, transform_indices = @transform_3, window_bounds = array<i64: 128, 128>}, {pipeline_mode = #tpu.pipeline_mode<synchronous>, transform_indices = @transform_4, window_bounds = array<i64: 1, 128>}, {pipeline_mode = #tpu.pipeline_mode<synchronous>, transform_indices = @transform_5, window_bounds = array<i64: 128, 128>}, {pipeline_mode = #tpu.pipeline_mode<synchronous>, transform_indices = @transform_6, window_bounds = array<i64: 1, 128>}, {transform_indices = @transform_7, window_bounds = array<i64: 16, 128>}]} {
    %c0 = arith.constant 0 : index
    %c0_0 = arith.constant 0 : index
    %0 = vector.load %arg1[%c0, %c0_0] : memref<16x16xbf16, #tpu.memory_space<vmem>>, vector<16x16xbf16>
    %c0_1 = arith.constant 0 : index
    %c0_2 = arith.constant 0 : index
    %1 = vector.load %arg2[%c0_1, %c0_2] : memref<16x128xbf16, #tpu.memory_space<vmem>>, vector<16x128xbf16>
    %cst = arith.constant dense<0.000000e+00> : vector<16x128xf32>
    %2 = tpu.matmul %0, %1, %cst {dimension_numbers = #tpu.dot_dimension_numbers<[1], [0], [0], [1], [0, 0, 1, 1], [], []>} : vector<16x16xbf16>, vector<16x128xbf16>, vector<16x128xf32> -> vector<16x128xf32>
    %c0_3 = arith.constant 0 : index
    %c0_4 = arith.constant 0 : index
    %3 = vector.load %arg3[%c0_3, %c0_4] : memref<1x128xf32, #tpu.memory_space<vmem>>, vector<1x128xf32>
    %4 = vector.broadcast %3 : vector<1x128xf32> to vector<16x128xf32>
    %5 = arith.addf %2, %4 : vector<16x128xf32>
    %cst_5 = arith.constant 0.000000e+00 : f32
    %6 = vector.broadcast %cst_5 : f32 to vector<16x128xf32>
    %7 = arith.maximumf %5, %6 : vector<16x128xf32>
    %8 = arith.truncf %7 : vector<16x128xf32> to vector<16x128xbf16>
    %c0_6 = arith.constant 0 : index
    %c0_7 = arith.constant 0 : index
    %9 = vector.load %arg4[%c0_6, %c0_7] : memref<128x128xbf16, #tpu.memory_space<vmem>>, vector<128x128xbf16>
    %cst_8 = arith.constant dense<0.000000e+00> : vector<16x128xf32>
    %10 = tpu.matmul %8, %9, %cst_8 {dimension_numbers = #tpu.dot_dimension_numbers<[1], [0], [0], [1], [0, 0, 1, 1], [], []>} : vector<16x128xbf16>, vector<128x128xbf16>, vector<16x128xf32> -> vector<16x128xf32>
    %c0_9 = arith.constant 0 : index
    %c0_10 = arith.constant 0 : index
    %11 = vector.load %arg5[%c0_9, %c0_10] : memref<1x128xf32, #tpu.memory_space<vmem>>, vector<1x128xf32>
    %12 = vector.broadcast %11 : vector<1x128xf32> to vector<16x128xf32>
    %13 = arith.addf %10, %12 : vector<16x128xf32>
    %14 = arith.negf %13 : vector<16x128xf32>
    %15 = math.exp %14 : vector<16x128xf32>
    %cst_11 = arith.constant 1.000000e+00 : f32
    %16 = vector.broadcast %cst_11 : f32 to vector<16x128xf32>
    %17 = arith.addf %16, %15 : vector<16x128xf32>
    %18 = arith.divf %16, %17 : vector<16x128xf32>
    %19 = arith.truncf %18 : vector<16x128xf32> to vector<16x128xbf16>
    %c0_12 = arith.constant 0 : index
    %c0_13 = arith.constant 0 : index
    %20 = vector.load %arg6[%c0_12, %c0_13] : memref<128x128xbf16, #tpu.memory_space<vmem>>, vector<128x128xbf16>
    %cst_14 = arith.constant dense<0.000000e+00> : vector<16x128xf32>
    %21 = tpu.matmul %19, %20, %cst_14 {dimension_numbers = #tpu.dot_dimension_numbers<[1], [0], [0], [1], [0, 0, 1, 1], [], []>} : vector<16x128xbf16>, vector<128x128xbf16>, vector<16x128xf32> -> vector<16x128xf32>
    %c0_15 = arith.constant 0 : index
    %c0_16 = arith.constant 0 : index
    %22 = vector.load %arg7[%c0_15, %c0_16] : memref<1x128xf32, #tpu.memory_space<vmem>>, vector<1x128xf32>
    %23 = vector.broadcast %22 : vector<1x128xf32> to vector<16x128xf32>
    %24 = arith.addf %21, %23 : vector<16x128xf32>
    %25 = arith.truncf %24 : vector<16x128xf32> to vector<16x128xbf16>
    %c0_17 = arith.constant 0 : index
    %c0_18 = arith.constant 0 : index
    %26 = vector.load %arg8[%c0_17, %c0_18] : memref<16x128xbf16, #tpu.memory_space<vmem>>, vector<16x128xbf16>
    tpu.vector_store %arg8[%c0_17, %c0_18], %25 {strides = array<i32>} : memref<16x128xbf16, #tpu.memory_space<vmem>>, vector<16x128xbf16>,
    return
  }
  func.func @transform_0(%arg0: i32) -> (i32, i32) {
    %c0_i32 = arith.constant 0 : i32
    %c0_i32_0 = arith.constant 0 : i32
    return %arg0, %c0_i32 : i32, i32
  }
  func.func @transform_1(%arg0: i32) -> (i32, i32) {
    %c0_i32 = arith.constant 0 : i32
    %c0_i32_0 = arith.constant 0 : i32
    %c0_i32_1 = arith.constant 0 : i32
    return %c0_i32, %c0_i32_0 : i32, i32
  }
  func.func @transform_2(%arg0: i32) -> (i32, i32) {
    %c0_i32 = arith.constant 0 : i32
    %c0_i32_0 = arith.constant 0 : i32
    %c0_i32_1 = arith.constant 0 : i32
    return %c0_i32, %c0_i32_0 : i32, i32
  }
  func.func @transform_3(%arg0: i32) -> (i32, i32) {
    %c0_i32 = arith.constant 0 : i32
    %c0_i32_0 = arith.constant 0 : i32
    %c0_i32_1 = arith.constant 0 : i32
    return %c0_i32, %c0_i32_0 : i32, i32
  }
  func.func @transform_4(%arg0: i32) -> (i32, i32) {
    %c0_i32 = arith.constant 0 : i32
    %c0_i32_0 = arith.constant 0 : i32
    %c0_i32_1 = arith.constant 0 : i32
    return %c0_i32, %c0_i32_0 : i32, i32
  }
  func.func @transform_5(%arg0: i32) -> (i32, i32) {
    %c0_i32 = arith.constant 0 : i32
    %c0_i32_0 = arith.constant 0 : i32
    %c0_i32_1 = arith.constant 0 : i32
    return %c0_i32, %c0_i32_0 : i32, i32
  }
  func.func @transform_6(%arg0: i32) -> (i32, i32) {
    %c0_i32 = arith.constant 0 : i32
    %c0_i32_0 = arith.constant 0 : i32
    %c0_i32_1 = arith.constant 0 : i32
    return %c0_i32, %c0_i32_0 : i32, i32
  }
  func.func @transform_7(%arg0: i32) -> (i32, i32) {
    %c0_i32 = arith.constant 0 : i32
    %c0_i32_0 = arith.constant 0 : i32
    return %arg0, %c0_i32 : i32, i32
  }
}

</mosaic_0001>

<llo_original>
// kernel: tpu_custom_call.1
$region0: #{tpu_custom_call.1}
  #allocation0 [shape = 'u32[]', space=smem, size = 0x4, offset = 0x4, fixed_abs, tag = 'smem constant byte address 0x4 - core index']
  #allocation1 [shape = 'u32[72,128]{1,0:T(1,128)}', space=vmem, size = 0x9000, scoped, tag = 'internal scratch']
  %s0 = inlined_call_operand.hbm [shape: bf16[16,16], index: 0, kind: input, shape index: {}]
  %s1 = inlined_call_operand.hbm [shape: bf16[16,128], index: 1, kind: input, shape index: {}]
  %s2 = inlined_call_operand.vmem [shape: f32[1,128], index: 2, kind: input, shape index: {}]
  %s3 = inlined_call_operand.hbm [shape: bf16[128,128], index: 3, kind: input, shape index: {}]
  %s4 = inlined_call_operand.vmem [shape: f32[1,128], index: 4, kind: input, shape index: {}]
  %s5 = inlined_call_operand.hbm [shape: bf16[128,128], index: 5, kind: input, shape index: {}]
  %s6 = inlined_call_operand.vmem [shape: f32[1,128], index: 6, kind: input, shape index: {}]
  %s7 = inlined_call_operand.hbm [shape: bf16[16,128], index: 7, kind: output, shape index: {}]
  %s8 = sld [smem:[#allocation0]]
  $region54: #{tpu_custom_call.1} parent=0
    _
  %s10 = ssub.s32 1, %s8
  %s11 = scalar_select 0, %s10, %s8
  $region1: #{tpu_custom_call.1} parent=0
    #allocation2 [shape = 'u8[4096]{0}', space=vmem, size = 0x1000, scoped, tag = 'input window, operand 0, single buffered']
    #allocation3 [shape = 's32[1]{0}', space=sflag, size = 0x4, scoped, tag = 'scoped memory for tpu_custom_call.1']
    #allocation4 [shape = 's32[1]{0}', space=sflag, size = 0x4, scoped, tag = 'scoped memory for tpu_custom_call.1']
    #allocation5 [shape = 'u8[4096]{0}', space=vmem, size = 0x1000, scoped, tag = 'input window, operand 1, single buffered']
    #allocation6 [shape = 's32[1]{0}', space=sflag, size = 0x4, scoped, tag = 'scoped memory for tpu_custom_call.1']
    #allocation7 [shape = 'u8[32768]{0}', space=vmem, size = 0x8000, scoped, tag = 'input window, operand 3, single buffered']
    #allocation8 [shape = 'u8[32768]{0}', space=vmem, size = 0x8000, scoped, tag = 'input window, operand 5, single buffered']
    #allocation9 [shape = 's32[1]{0}', space=sflag, size = 0x4, scoped, tag = 'scoped memory for tpu_custom_call.1']
    #allocation10 [shape = 'u8[4096]{0}', space=vmem, size = 0x1000, scoped, tag = 'output window, operand 0, single buffered']
    %12 = vsyncpa [#allocation3], 0
    %13 = vsyncpa [#allocation6], 0
    %14 = vsyncpa [#allocation9], 0
    %15 = vsyncpa [#allocation4], 0
    // Predicated region
    $region2: #{tpu_custom_call.1} parent=1 // pred_check
      _
    $region3: #{tpu_custom_call.1} parent=1 // pred_check_branch
      %17 = sbr.rel (0) target = $region5
    $region4: #{tpu_custom_call.1} parent=1 // pred_region
      %19 = vsyncadd [#allocation3], 0
      %s20 = sshll.u32 %s0, 4
      %s21 = int_to_ptr.hbm [resolvable:$true] %s20
      %s22 = sshll.u32 [#allocation2], 4
      %s23 = int_to_ptr.vmem [resolvable:$true] %s22
      %28 = dma.hbm_to_vmem [thread:$0]  %s21, 128, %s23, [#allocation3], 64, 64, 4
    $region5: #{tpu_custom_call.1} parent=1 // pred_fallthru
      _
    // Predicated region
    $region6: #{tpu_custom_call.1} parent=1 // pred_check
      _
    $region7: #{tpu_custom_call.1} parent=1 // pred_check_branch
      %30 = sbr.rel (0) target = $region9
    $region8: #{tpu_custom_call.1} parent=1 // pred_region
      %32 = vsyncadd [#allocation6], 0
      %s33 = sshll.u32 %s1, 4
      %s34 = int_to_ptr.hbm [resolvable:$true] %s33
      %s35 = sshll.u32 [#allocation5], 4
      %s36 = int_to_ptr.vmem [resolvable:$true] %s35
      %41 = dma.hbm_to_vmem [thread:$0]  %s34, 128, %s36, [#allocation6], 64, 64, 4
    $region9: #{tpu_custom_call.1} parent=1 // pred_fallthru
      _
    // Predicated region
    $region10: #{tpu_custom_call.1} parent=1 // pred_check
      _
    $region11: #{tpu_custom_call.1} parent=1 // pred_check_branch
      %43 = sbr.rel (0) target = $region13
    $region12: #{tpu_custom_call.1} parent=1 // pred_region
      _
    $region13: #{tpu_custom_call.1} parent=1 // pred_fallthru
      _
    // Predicated region
    $region14: #{tpu_custom_call.1} parent=1 // pred_check
      _
    $region15: #{tpu_custom_call.1} parent=1 // pred_check_branch
      %45 = sbr.rel (0) target = $region17
    $region16: #{tpu_custom_call.1} parent=1 // pred_region
      %47 = vsyncadd [#allocation6], 0
      %s48 = sshll.u32 %s3, 4
      %s49 = int_to_ptr.hbm [resolvable:$true] %s48
      %s50 = sshll.u32 [#allocation7], 4
      %s51 = int_to_ptr.vmem [resolvable:$true] %s50
      %56 = dma.hbm_to_vmem [thread:$0]  %s49, 1024, %s51, [#allocation6], 64, 64, 4
    $region17: #{tpu_custom_call.1} parent=1 // pred_fallthru
      _
    // Predicated region
    $region18: #{tpu_custom_call.1} parent=1 // pred_check
      _
    $region19: #{tpu_custom_call.1} parent=1 // pred_check_branch
      %58 = sbr.rel (0) target = $region21
    $region20: #{tpu_custom_call.1} parent=1 // pred_region
      _
    $region21: #{tpu_custom_call.1} parent=1 // pred_fallthru
      _
    // Predicated region
    $region22: #{tpu_custom_call.1} parent=1 // pred_check
      _
    $region23: #{tpu_custom_call.1} parent=1 // pred_check_branch
      %60 = sbr.rel (0) target = $region25
    $region24: #{tpu_custom_call.1} parent=1 // pred_region
      %62 = vsyncadd [#allocation9], 0
      %s63 = sshll.u32 %s5, 4
      %s64 = int_to_ptr.hbm [resolvable:$true] %s63
      %s65 = sshll.u32 [#allocation8], 4
      %s66 = int_to_ptr.vmem [resolvable:$true] %s65
      %71 = dma.hbm_to_vmem [thread:$0]  %s64, 1024, %s66, [#allocation9], 64, 64, 4
    $region25: #{tpu_custom_call.1} parent=1 // pred_fallthru
      _
    // Predicated region
    $region26: #{tpu_custom_call.1} parent=1 // pred_check
      _
    $region27: #{tpu_custom_call.1} parent=1 // pred_check_branch
      %73 = sbr.rel (0) target = $region29
    $region28: #{tpu_custom_call.1} parent=1 // pred_region
      _
    $region29: #{tpu_custom_call.1} parent=1 // pred_fallthru
      _
    // Predicated region
    $region30: #{tpu_custom_call.1} parent=1 // pred_check
      _
    $region31: #{tpu_custom_call.1} parent=1 // pred_check_branch
      %75 = sbr.rel (0) target = $region33
    $region32: #{tpu_custom_call.1} parent=1 // pred_region
      %77 = dma.done [#allocation3], 128
    $region33: #{tpu_custom_call.1} parent=1 // pred_fallthru
      _
    // Predicated region
    $region34: #{tpu_custom_call.1} parent=1 // pred_check
      _
    $region35: #{tpu_custom_call.1} parent=1 // pred_check_branch
      %79 = sbr.rel (0) target = $region37
    $region36: #{tpu_custom_call.1} parent=1 // pred_region
      %81 = dma.done [#allocation6], 128
    $region37: #{tpu_custom_call.1} parent=1 // pred_fallthru
      _
    // Predicated region
    $region38: #{tpu_custom_call.1} parent=1 // pred_check
      _
    $region39: #{tpu_custom_call.1} parent=1 // pred_check_branch
      %83 = sbr.rel (0) target = $region41
    $region40: #{tpu_custom_call.1} parent=1 // pred_region
      %85 = dma.done [#allocation6], 1024
    $region41: #{tpu_custom_call.1} parent=1 // pred_fallthru
      _
    // Predicated region
    $region42: #{tpu_custom_call.1} parent=1 // pred_check
      _
    $region43: #{tpu_custom_call.1} parent=1 // pred_check_branch
      %87 = sbr.rel (0) target = $region45
    $region44: #{tpu_custom_call.1} parent=1 // pred_region
      %89 = dma.done [#allocation9], 1024
    $region45: #{tpu_custom_call.1} parent=1 // pred_fallthru
      _
    %v91 = vld [vmem:[#allocation2] sm:$0xf]
    %v92 = vld [vmem:[#allocation2 + $0x4] sm:$0xf]
    %v93 = vld [vmem:[#allocation5] sm:$0xf]
    %v94 = vld [vmem:[#allocation5 + $0x4] sm:$0xf]
    %v95 = vld [vmem:[%s2] sm:$0x1]
    %v97 = vperm.slane %v95, 0
    %v101 = vunpack.c.l.b16 %v91
    %v102 = vunpack.c.l.b16 %v92
    %v103 = vpack.c.b16 %v102, %v101
    %v106 = vunpack.c.l.b16 %v93
    %v107 = vunpack.c.l.b16 %v94
    %v108 = vpack.c.b16 %v107, %v106
    %vm110 = vcmask 130048
    %v112 = vsel %vm110, %v103, 0
    %114 = vmatpush.bf16.msra.mxu0 0
    %115 = vmatpush.bf16.msra.mxu0 0
    %116 = vmatpush.bf16.msra.mxu0 0
    %117 = vmatpush.bf16.msra.mxu0 0
    %118 = vmatpush.bf16.msra.mxu0 0
    %119 = vmatpush.bf16.msra.mxu0 0
    %120 = vmatpush.bf16.msra.mxu0 0
    %121 = vmatpush.bf16.msra.mxu0 %v108
    %122 = vmatmul.bf16.gmra.mxu0 %v112
    %v123 = vpop.f32.mrf.mxu0
    %v124 = vadd.f32 %v97, %v123
    %v125 = vpop.f32.mrf.mxu0
    %v126 = vadd.f32 %v97, %v125
    %127 = vdwg.mxu0
    %v128 = vmax.f32 %v124, 0.0
    %v129 = vmax.f32 %v126, 0.0
    %v130 = vpack.c.bf16 %v129, %v128
    %v131 = vld [vmem:[#allocation7] sm:$0xf]
    %v132 = vld [vmem:[#allocation7 + $0x4] sm:$0xf]
    %v133 = vld [vmem:[#allocation7 + $0x8] sm:$0xf]
    %v134 = vld [vmem:[#allocation7 + $0xc] sm:$0xf]
    %v135 = vld [vmem:[#allocation7 + $0x10] sm:$0xf]
    %v136 = vld [vmem:[#allocation7 + $0x14] sm:$0xf]
    %v137 = vld [vmem:[#allocation7 + $0x18] sm:$0xf]
    %v138 = vld [vmem:[#allocation7 + $0x1c] sm:$0xf]
    %v139 = vld [vmem:[#allocation7 + $0x20] sm:$0xf]
    %v140 = vld [vmem:[#allocation7 + $0x24] sm:$0xf]
    %v141 = vld [vmem:[#allocation7 + $0x28] sm:$0xf]
    %v142 = vld [vmem:[#allocation7 + $0x2c] sm:$0xf]
    %v143 = vld [vmem:[#allocation7 + $0x30] sm:$0xf]
    %v144 = vld [vmem:[#allocation7 + $0x34] sm:$0xf]
    %v145 = vld [vmem:[#allocation7 + $0x38] sm:$0xf]
    %v146 = vld [vmem:[#allocation7 + $0x3c] sm:$0xf]
    %v147 = vld [vmem:[%s4] sm:$0x1]
    %v149 = vperm.slane %v147, 0
    %v167 = vunpack.c.l.b16 %v131
    %v168 = vunpack.c.l.b16 %v132
    %v169 = vunpack.c.l.b16 %v133
    %v170 = vunpack.c.l.b16 %v134
    %v171 = vunpack.c.l.b16 %v135
    %v172 = vunpack.c.l.b16 %v136
    %v173 = vunpack.c.l.b16 %v137
    %v174 = vunpack.c.l.b16 %v138
    %v175 = vunpack.c.l.b16 %v139
    %v176 = vunpack.c.l.b16 %v140
    %v177 = vunpack.c.l.b16 %v141
    %v178 = vunpack.c.l.b16 %v142
    %v179 = vunpack.c.l.b16 %v143
    %v180 = vunpack.c.l.b16 %v144
    %v181 = vunpack.c.l.b16 %v145
    %v182 = vunpack.c.l.b16 %v146
    %v183 = vpack.c.b16 %v168, %v167
    %v184 = vpack.c.b16 %v170, %v169
    %v185 = vpack.c.b16 %v172, %v171
    %v186 = vpack.c.b16 %v174, %v173
    %v187 = vpack.c.b16 %v176, %v175
    %v188 = vpack.c.b16 %v178, %v177
    %v189 = vpack.c.b16 %v180, %v179
    %v190 = vpack.c.b16 %v182, %v181
    %199 = vmatpush.bf16.msra.mxu0 %v190
    %200 = vmatpush.bf16.msra.mxu0 %v189
    %201 = vmatpush.bf16.msra.mxu0 %v188
    %202 = vmatpush.bf16.msra.mxu0 %v187
    %203 = vmatpush.bf16.msra.mxu0 %v186
    %204 = vmatpush.bf16.msra.mxu0 %v185
    %205 = vmatpush.bf16.msra.mxu0 %v184
    %206 = vmatpush.bf16.msra.mxu0 %v183
    %207 = vmatmul.bf16.gmra.mxu0 %v130
    %v208 = vpop.f32.mrf.mxu0
    %v209 = vadd.f32 %v149, %v208
    %v210 = vpop.f32.mrf.mxu0
    %v211 = vadd.f32 %v149, %v210
    %212 = vdwg.mxu0
    %v213 = vxor.u32 %v209, 2147483648
    %v214 = vxor.u32 %v211, 2147483648
    %v215 = vmul.f32 %v213, 1.442695
    %v216 = vpow.pop %v215
    %v217 = vmul.f32 %v214, 1.442695
    %v218 = vpow.pop %v217
    %v219 = vadd.f32 %v216, 1.0
    %v220 = vadd.f32 %v218, 1.0
    %v221 = vrcp.pop %v219
    %v222 = vmul.f32 %v219, %v221
    %v223 = vsub.f32 1.0, %v222
    %v224 = vmul.f32 %v221, %v223
    %v225 = vadd.f32 %v221, %v224
    %vm226 = vweird.f32 %v219
    %vm227 = vweird.f32 %v221
    %vm228 = vmor %vm226, %vm227
    %v229 = vsel %vm228, %v221, %v225
    %v230 = vand.u32 2147483647, %v219
    %vm231 = vcmp.eq.f32.partialorder %v230, 8.507059e+37
    %v232 = vand.u32 %v219, 2147483648
    %v233 = vor.u32 1.1754944e-38, %v232
    %v234 = vsel %vm231, %v233, %v229
    %v235 = vmul.f32 1.0, %v234
    %v236 = vrcp.pop %v220
    %v237 = vmul.f32 %v220, %v236
    %v238 = vsub.f32 1.0, %v237
    %v239 = vmul.f32 %v236, %v238
    %v240 = vadd.f32 %v236, %v239
    %vm241 = vweird.f32 %v220
    %vm242 = vweird.f32 %v236
    %vm243 = vmor %vm241, %vm242
    %v244 = vsel %vm243, %v236, %v240
    %v245 = vand.u32 2147483647, %v220
    %vm246 = vcmp.eq.f32.partialorder %v245, 8.507059e+37
    %v247 = vand.u32 %v220, 2147483648
    %v248 = vor.u32 1.1754944e-38, %v247
    %v249 = vsel %vm246, %v248, %v244
    %v250 = vmul.f32 1.0, %v249
    %v251 = vpack.c.bf16 %v250, %v235
    %v252 = vld [vmem:[#allocation8] sm:$0xf]
    %v253 = vld [vmem:[#allocation8 + $0x4] sm:$0xf]
    %v254 = vld [vmem:[#allocation8 + $0x8] sm:$0xf]
    %v255 = vld [vmem:[#allocation8 + $0xc] sm:$0xf]
    %v256 = vld [vmem:[#allocation8 + $0x10] sm:$0xf]
    %v257 = vld [vmem:[#allocation8 + $0x14] sm:$0xf]
    %v258 = vld [vmem:[#allocation8 + $0x18] sm:$0xf]
    %v259 = vld [vmem:[#allocation8 + $0x1c] sm:$0xf]
    %v260 = vld [vmem:[#allocation8 + $0x20] sm:$0xf]
    %v261 = vld [vmem:[#allocation8 + $0x24] sm:$0xf]
    %v262 = vld [vmem:[#allocation8 + $0x28] sm:$0xf]
    %v263 = vld [vmem:[#allocation8 + $0x2c] sm:$0xf]
    %v264 = vld [vmem:[#allocation8 + $0x30] sm:$0xf]
    %v265 = vld [vmem:[#allocation8 + $0x34] sm:$0xf]
    %v266 = vld [vmem:[#allocation8 + $0x38] sm:$0xf]
    %v267 = vld [vmem:[#allocation8 + $0x3c] sm:$0xf]
    %v268 = vld [vmem:[%s6] sm:$0x1]
    %v270 = vperm.slane %v268, 0
    %v288 = vunpack.c.l.b16 %v252
    %v289 = vunpack.c.l.b16 %v253
    %v290 = vunpack.c.l.b16 %v254
    %v291 = vunpack.c.l.b16 %v255
    %v292 = vunpack.c.l.b16 %v256
    %v293 = vunpack.c.l.b16 %v257
    %v294 = vunpack.c.l.b16 %v258
    %v295 = vunpack.c.l.b16 %v259
    %v296 = vunpack.c.l.b16 %v260
    %v297 = vunpack.c.l.b16 %v261
    %v298 = vunpack.c.l.b16 %v262
    %v299 = vunpack.c.l.b16 %v263
    %v300 = vunpack.c.l.b16 %v264
    %v301 = vunpack.c.l.b16 %v265
    %v302 = vunpack.c.l.b16 %v266
    %v303 = vunpack.c.l.b16 %v267
    %v304 = vpack.c.b16 %v289, %v288
    %v305 = vpack.c.b16 %v291, %v290
    %v306 = vpack.c.b16 %v293, %v292
    %v307 = vpack.c.b16 %v295, %v294
    %v308 = vpack.c.b16 %v297, %v296
    %v309 = vpack.c.b16 %v299, %v298
    %v310 = vpack.c.b16 %v301, %v300
    %v311 = vpack.c.b16 %v303, %v302
    %320 = vmatpush.bf16.msra.mxu0 %v311
    %321 = vmatpush.bf16.msra.mxu0 %v310
    %322 = vmatpush.bf16.msra.mxu0 %v309
    %323 = vmatpush.bf16.msra.mxu0 %v308
    %324 = vmatpush.bf16.msra.mxu0 %v307
    %325 = vmatpush.bf16.msra.mxu0 %v306
    %326 = vmatpush.bf16.msra.mxu0 %v305
    %327 = vmatpush.bf16.msra.mxu0 %v304
    %328 = vmatmul.bf16.gmra.mxu0 %v251
    %v329 = vpop.f32.mrf.mxu0
    %v330 = vadd.f32 %v270, %v329
    %v331 = vpop.f32.mrf.mxu0
    %v332 = vadd.f32 %v270, %v331
    %333 = vdwg.mxu0
    %v334 = vpack.c.bf16 %v330, %v330
    %v335 = vpack.c.bf16 %v332, %v332
    %336 = vst [vmem:[#allocation10] sm:$0xf] %v334
    %337 = vst [vmem:[#allocation10 + $0x4] sm:$0xf] %v335
    // Predicated region
    $region46: #{tpu_custom_call.1} parent=1 // pred_check
      _
    $region47: #{tpu_custom_call.1} parent=1 // pred_check_branch
      %339 = sbr.rel (0) target = $region49
    $region48: #{tpu_custom_call.1} parent=1 // pred_region
      %341 = vsyncadd [#allocation4], 0
      %s342 = sshll.u32 [#allocation10], 4
      %s343 = int_to_ptr.vmem [resolvable:$true] %s342
      %s344 = sshll.u32 %s7, 4
      %s345 = int_to_ptr.hbm [resolvable:$true] %s344
      %350 = dma.vmem_to_hbm [thread:$0]  %s343, 128, %s345, [#allocation4], 64, 64, 4
    $region49: #{tpu_custom_call.1} parent=1 // pred_fallthru
      _
    // Predicated region
    $region50: #{tpu_custom_call.1} parent=1 // pred_check
      _
    $region51: #{tpu_custom_call.1} parent=1 // pred_check_branch
      %352 = sbr.rel (0) target = $region53
    $region52: #{tpu_custom_call.1} parent=1 // pred_region
      %354 = dma.done [#allocation4], 128
    $region53: #{tpu_custom_call.1} parent=1 // pred_fallthru
      _
    %355 = vsyncpa [#allocation3], 1
    %356 = vsyncpa [#allocation6], 1
    %357 = vsyncpa [#allocation9], 1
    %358 = vsyncpa [#allocation4], 1

</llo_original>
